<compile_context>
chip_gen: v7x
topology: tpu7x:2x2x1
jax: 0.10.0
libtpu: 0.0.40
codegen_flags: <defaults>
</compile_context>

<pallas_src>
import jax
import jax.numpy as jnp
from jax.experimental import pallas as pl
from jax.experimental.pallas import tpu as pltpu


def _attention_kernel(x_ref, w_att_ref, b_att_ref, w_ctx_ref,
                      ctx_out_ref, attnw_out_ref):
    # x_ref:         (Bt, S, H)  batch tile of lstm_output (f32 or bf16)
    # w_att_ref:     (H, H)      attention.weight pre-transposed -> (in, out)
    # b_att_ref:     (1, H)      attention.bias (f32)
    # w_ctx_ref:     (1, H)      context_vector.weight row (f32)
    # ctx_out_ref:   (Bt, H)     f32
    # attnw_out_ref: (Bt, S)     f32, lane-dense (wrapper reshapes to (B, S, 1))
    Bt, S, H = x_ref.shape

    # --- Linear(H, H) + tanh on a (Bt*S, H) slab: one big MXU matmul --------
    # (S is a multiple of the sublane count here, so the reshape is a no-op.)
    x2 = x_ref[...].reshape(Bt * S, H)
    scores = jnp.tanh(
        jnp.dot(x2, w_att_ref[...], preferred_element_type=jnp.float32)
        + b_att_ref[...])                                        # (Bt*S, H) f32

    # --- H -> 1 projection kept off the MXU: VPU mul + lane reduction -------
    logits = jnp.sum(scores.reshape(Bt, S, H) * w_ctx_ref[...], axis=-1)  # (Bt, S)

    # --- numerically stable softmax over the sequence axis (lane axis) ------
    m = jnp.max(logits, axis=-1, keepdims=True)                  # (Bt, 1)
    e = jnp.exp(logits - m)                                      # (Bt, S)
    denom = jnp.sum(e, axis=-1, keepdims=True)                   # (Bt, 1)
    weights = e * pl.reciprocal(denom, approx=True)              # (Bt, S)

    # --- context = sum_s(weights * x): VPU broadcast-mul + sublane reduce ---
    x_f32 = x_ref[...].astype(jnp.float32)                       # (Bt, S, H)
    ctx = jnp.sum(weights[:, :, None] * x_f32, axis=1)           # (Bt, H)

    ctx_out_ref[...] = ctx
    attnw_out_ref[...] = weights                                 # lane-dense store


def attention_forward(lstm_output, w_att, b_att, w_ctx, *,
                      batch_tile=None, mxu_dtype=jnp.float32):
    """Fused attention forward.

    lstm_output: (B, S, H) float
    w_att: (H, H)  attention.weight (PyTorch layout: out x in)
    b_att: (H,)    attention.bias
    w_ctx: (1, H)  context_vector.weight (PyTorch layout)
    mxu_dtype: dtype fed to the MXU for x / W_att (use jnp.bfloat16 on v6e/v7x);
               accumulation and all elementwise math stay in f32.
    Returns (context_vector (B, H) f32, attention_weights (B, S, 1) f32).
    """
    B, S, H = lstm_output.shape

    if batch_tile is None:
        # Target M = batch_tile*S ~ 256 rows per grid step to fill the MXU ...
        batch_tile = max(1, 256 // max(S, 1))
        # ... but keep >= 2 grid steps when B allows (v7x has 2 TensorCores).
        if B >= 2:
            batch_tile = min(batch_tile, pl.cdiv(B, 2))
        batch_tile = min(batch_tile, B)
        # Sublane-align the tile (it is the sublane dim of the 2-D outputs).
        if batch_tile >= 8:
            batch_tile = (batch_tile // 8) * 8

    num_blocks = pl.cdiv(B, batch_tile)
    Bp = num_blocks * batch_tile

    x = jnp.asarray(lstm_output, jnp.float32)
    if Bp != B:
        x = jnp.pad(x, ((0, Bp - B), (0, 0), (0, 0)))
    x = x.astype(mxu_dtype)

    w_att_t = jnp.asarray(w_att, jnp.float32).T.astype(mxu_dtype)   # (in, out)
    b_att_2d = jnp.asarray(b_att, jnp.float32).reshape(1, H)
    w_ctx_row = jnp.asarray(w_ctx, jnp.float32).reshape(1, H)

    grid_spec = pltpu.PrefetchScalarGridSpec(
        num_scalar_prefetch=0,
        grid=(num_blocks,),
        in_specs=[
            pl.BlockSpec((batch_tile, S, H), lambda b: (b, 0, 0)),
            # Shared weights, constant index maps.  (For large production H:
            # single-buffer these and/or keep W_att in bf16 for v7x's 64 MiB
            # VMEM; irrelevant at these shapes.)
            pl.BlockSpec((H, H), lambda b: (0, 0)),
            pl.BlockSpec((1, H), lambda b: (0, 0)),
            pl.BlockSpec((1, H), lambda b: (0, 0)),
        ],
        out_specs=[
            pl.BlockSpec((batch_tile, H), lambda b: (b, 0)),
            pl.BlockSpec((batch_tile, S), lambda b: (b, 0)),   # lane-dense weights
        ],
    )

    ctx, attn_w = pl.pallas_call(
        _attention_kernel,
        out_shape=(
            jax.ShapeDtypeStruct((Bp, H), jnp.float32),
            jax.ShapeDtypeStruct((Bp, S), jnp.float32),
        ),
        grid_spec=grid_spec,
        compiler_params=pltpu.CompilerParams(
            dimension_semantics=("parallel",)),
    )(x, w_att_t, b_att_2d, w_ctx_row)

    return ctx[:B], attn_w[:B].reshape(B, S, 1)


def _reference(lstm_output, w_att, b_att, w_ctx):
    # Pure-JAX reference mirroring the PyTorch forward exactly.
    scores = jnp.tanh(jnp.einsum("bsh,oh->bso", lstm_output, w_att) + b_att)
    logits = jnp.einsum("bsh,oh->bso", scores, w_ctx)            # (B, S, 1)
    weights = jax.nn.softmax(logits, axis=1)
    ctx = jnp.sum(weights * lstm_output, axis=1)
    return ctx, weights


if __name__ == "__main__":
    # Small shapes consistent with the module; B=16 exercises the batch-tiled
    # grid (2 steps of batch_tile=8 -> M = 64 rows per MXU matmul).
    B, S, H = 16, 8, 32
    key = jax.random.PRNGKey(0)
    k1, k2, k3, k4 = jax.random.split(key, 4)

    lstm_output = jax.random.normal(k1, (B, S, H), dtype=jnp.float32)
    w_att = jax.random.normal(k2, (H, H), dtype=jnp.float32) * 0.1   # attention.weight
    b_att = jax.random.normal(k3, (H,), dtype=jnp.float32) * 0.1     # attention.bias
    w_ctx = jax.random.normal(k4, (1, H), dtype=jnp.float32) * 0.1   # context_vector.weight

    ref_ctx, ref_w = _reference(lstm_output, w_att, b_att, w_ctx)

    # f32 MXU-input path.
    ctx, attn_w = attention_forward(lstm_output, w_att, b_att, w_ctx)
    jax.block_until_ready((ctx, attn_w))
    assert ctx.shape == (B, H) and attn_w.shape == (B, S, 1)
    # approx reciprocal in the softmax is ~1e-4-level accurate -> modest tol.
    assert jnp.allclose(ctx, ref_ctx, atol=5e-3, rtol=5e-3)
    assert jnp.allclose(attn_w, ref_w, atol=5e-3, rtol=5e-3)

    # bf16 MXU-input path (recommended on v6e/v7x); elementwise math stays f32.
    ctx_bf, attn_bf = attention_forward(lstm_output, w_att, b_att, w_ctx,
                                        mxu_dtype=jnp.bfloat16)
    jax.block_until_ready((ctx_bf, attn_bf))
    assert jnp.allclose(ctx_bf, ref_ctx, atol=5e-2, rtol=5e-2)
    assert jnp.allclose(attn_bf, ref_w, atol=5e-2, rtol=5e-2)

    print("KERNEL_OK")
</pallas_src>

<mosaic_0001>
module attributes {stable_mosaic.version = 11 : i64} {
  func.func @_attention_kernel(%arg0: i32, %arg1: memref<8x8x32xf32, #tpu.memory_space<vmem>>, %arg2: memref<32x32xf32, #tpu.memory_space<vmem>>, %arg3: memref<1x32xf32, #tpu.memory_space<vmem>>, %arg4: memref<1x32xf32, #tpu.memory_space<vmem>>, %arg5: memref<8x32xf32, #tpu.memory_space<vmem>>, %arg6: memref<8x8xf32, #tpu.memory_space<vmem>>) attributes {dimension_semantics = [#tpu.dimension_semantics<parallel>], iteration_bounds = array<i64: 2>, scalar_prefetch = 0 : i64, scratch_operands = 0 : i64, tpu.core_type = #tpu.core_type<tc>, window_params = [{transform_indices = @transform_0, window_bounds = array<i64: 8, 8, 32>}, {pipeline_mode = #tpu.pipeline_mode<synchronous>, transform_indices = @transform_1, window_bounds = array<i64: 32, 32>}, {pipeline_mode = #tpu.pipeline_mode<synchronous>, transform_indices = @transform_2, window_bounds = array<i64: 1, 32>}, {pipeline_mode = #tpu.pipeline_mode<synchronous>, transform_indices = @transform_3, window_bounds = array<i64: 1, 32>}, {transform_indices = @transform_4, window_bounds = array<i64: 8, 32>}, {transform_indices = @transform_5, window_bounds = array<i64: 8, 8>}]} {
    %c0 = arith.constant 0 : index
    %c0_0 = arith.constant 0 : index
    %c0_1 = arith.constant 0 : index
    %0 = vector.load %arg1[%c0, %c0_0, %c0_1] : memref<8x8x32xf32, #tpu.memory_space<vmem>>, vector<8x8x32xf32>
    %1 = vector.shape_cast %0 : vector<8x8x32xf32> to vector<64x32xf32>
    %c0_2 = arith.constant 0 : index
    %c0_3 = arith.constant 0 : index
    %2 = vector.load %arg2[%c0_2, %c0_3] : memref<32x32xf32, #tpu.memory_space<vmem>>, vector<32x32xf32>
    %cst = arith.constant dense<0.000000e+00> : vector<64x32xf32>
    %3 = tpu.matmul %1, %2, %cst {dimension_numbers = #tpu.dot_dimension_numbers<[1], [0], [0], [1], [0, 0, 1, 1], [], []>} : vector<64x32xf32>, vector<32x32xf32>, vector<64x32xf32> -> vector<64x32xf32>
    %c0_4 = arith.constant 0 : index
    %c0_5 = arith.constant 0 : index
    %4 = vector.load %arg3[%c0_4, %c0_5] : memref<1x32xf32, #tpu.memory_space<vmem>>, vector<1x32xf32>
    %5 = vector.broadcast %4 : vector<1x32xf32> to vector<64x32xf32>
    %6 = arith.addf %3, %5 : vector<64x32xf32>
    %7 = math.tanh %6 : vector<64x32xf32>
    %8 = vector.shape_cast %7 : vector<64x32xf32> to vector<8x8x32xf32>
    %c0_6 = arith.constant 0 : index
    %c0_7 = arith.constant 0 : index
    %9 = vector.load %arg4[%c0_6, %c0_7] : memref<1x32xf32, #tpu.memory_space<vmem>>, vector<1x32xf32>
    %10 = vector.shape_cast %9 : vector<1x32xf32> to vector<1x1x32xf32>
    %11 = vector.broadcast %10 : vector<1x1x32xf32> to vector<8x8x32xf32>
    %12 = arith.mulf %8, %11 : vector<8x8x32xf32>
    %cst_8 = arith.constant dense<0.000000e+00> : vector<8x8xf32>
    %13 = vector.multi_reduction <add>, %12, %cst_8 [2] : vector<8x8x32xf32> to vector<8x8xf32>
    %cst_9 = arith.constant dense<0xFF800000> : vector<8xf32>
    %14 = vector.multi_reduction <maximumf>, %13, %cst_9 [1] : vector<8x8xf32> to vector<8xf32>
    %15 = vector.shape_cast %14 : vector<8xf32> to vector<8x1xf32>
    %16 = vector.broadcast %15 : vector<8x1xf32> to vector<8x8xf32>
    %17 = arith.subf %13, %16 : vector<8x8xf32>
    %18 = math.exp %17 : vector<8x8xf32>
    %cst_10 = arith.constant dense<0.000000e+00> : vector<8xf32>
    %19 = vector.multi_reduction <add>, %18, %cst_10 [1] : vector<8x8xf32> to vector<8xf32>
    %20 = vector.shape_cast %19 : vector<8xf32> to vector<8x1xf32>
    %21 = tpu.reciprocal %20 {approx = true} : vector<8x1xf32> -> vector<8x1xf32>
    %22 = vector.broadcast %21 : vector<8x1xf32> to vector<8x8xf32>
    %23 = arith.mulf %18, %22 : vector<8x8xf32>
    %c0_11 = arith.constant 0 : index
    %c0_12 = arith.constant 0 : index
    %c0_13 = arith.constant 0 : index
    %24 = vector.load %arg1[%c0_11, %c0_12, %c0_13] : memref<8x8x32xf32, #tpu.memory_space<vmem>>, vector<8x8x32xf32>
    %25 = vector.shape_cast %23 : vector<8x8xf32> to vector<8x8x1xf32>
    %26 = vector.broadcast %25 : vector<8x8x1xf32> to vector<8x8x32xf32>
    %27 = arith.mulf %26, %24 : vector<8x8x32xf32>
    %cst_14 = arith.constant dense<0.000000e+00> : vector<8x32xf32>
    %28 = vector.multi_reduction <add>, %27, %cst_14 [1] : vector<8x8x32xf32> to vector<8x32xf32>
    %c0_15 = arith.constant 0 : index
    %c0_16 = arith.constant 0 : index
    %29 = vector.load %arg5[%c0_15, %c0_16] : memref<8x32xf32, #tpu.memory_space<vmem>>, vector<8x32xf32>
    tpu.vector_store %arg5[%c0_15, %c0_16], %28 {strides = array<i32>} : memref<8x32xf32, #tpu.memory_space<vmem>>, vector<8x32xf32>,
    %c0_17 = arith.constant 0 : index
    %c0_18 = arith.constant 0 : index
    %30 = vector.load %arg6[%c0_17, %c0_18] : memref<8x8xf32, #tpu.memory_space<vmem>>, vector<8x8xf32>
    tpu.vector_store %arg6[%c0_17, %c0_18], %23 {strides = array<i32>} : memref<8x8xf32, #tpu.memory_space<vmem>>, vector<8x8xf32>,
    return
  }
  func.func @transform_0(%arg0: i32) -> (i32, i32, i32) {
    %c0_i32 = arith.constant 0 : i32
    %c0_i32_0 = arith.constant 0 : i32
    %c0_i32_1 = arith.constant 0 : i32
    return %arg0, %c0_i32, %c0_i32_0 : i32, i32, i32
  }
  func.func @transform_1(%arg0: i32) -> (i32, i32) {
    %c0_i32 = arith.constant 0 : i32
    %c0_i32_0 = arith.constant 0 : i32
    %c0_i32_1 = arith.constant 0 : i32
    return %c0_i32, %c0_i32_0 : i32, i32
  }
  func.func @transform_2(%arg0: i32) -> (i32, i32) {
    %c0_i32 = arith.constant 0 : i32
    %c0_i32_0 = arith.constant 0 : i32
    %c0_i32_1 = arith.constant 0 : i32
    return %c0_i32, %c0_i32_0 : i32, i32
  }
  func.func @transform_3(%arg0: i32) -> (i32, i32) {
    %c0_i32 = arith.constant 0 : i32
    %c0_i32_0 = arith.constant 0 : i32
    %c0_i32_1 = arith.constant 0 : i32
    return %c0_i32, %c0_i32_0 : i32, i32
  }
  func.func @transform_4(%arg0: i32) -> (i32, i32) {
    %c0_i32 = arith.constant 0 : i32
    %c0_i32_0 = arith.constant 0 : i32
    return %arg0, %c0_i32 : i32, i32
  }
  func.func @transform_5(%arg0: i32) -> (i32, i32) {
    %c0_i32 = arith.constant 0 : i32
    %c0_i32_0 = arith.constant 0 : i32
    return %arg0, %c0_i32 : i32, i32
  }
}

</mosaic_0001>

<llo_original>
// kernel: tpu_custom_call.1
$region0: #{tpu_custom_call.1}
  #allocation0 [shape = 'u32[]', space=smem, size = 0x4, offset = 0x4, fixed_abs, tag = 'smem constant byte address 0x4 - core index']
  #allocation1 [shape = 'u32[144,128]{1,0:T(1,128)}', space=vmem, size = 0x12000, scoped, tag = 'internal scratch']
  %s0 = inlined_call_operand.hbm [shape: f32[16,8,32], index: 0, kind: input, shape index: {}]
  %s1 = inlined_call_operand.hbm [shape: f32[32,32], index: 1, kind: input, shape index: {}]
  %s2 = inlined_call_operand.vmem [shape: f32[1,32], index: 2, kind: input, shape index: {}]
  %s3 = inlined_call_operand.vmem [shape: f32[1,32], index: 3, kind: input, shape index: {}]
  %s4 = inlined_call_operand.hbm [shape: f32[16,32], index: 4, kind: output, shape index: {0}]
  %s5 = inlined_call_operand.vmem [shape: f32[16,8], index: 5, kind: output, shape index: {1}]
  %6 = xla_tuple %s4, %s5
  %s7 = sld [smem:[#allocation0]]
  $region65: #{tpu_custom_call.1} parent=0
    _
  %s9 = ssub.s32 1, %s7
  %s10 = scalar_select 0, %s9, %s7
  $region1: #{tpu_custom_call.1} parent=0
    #allocation2 [shape = 'u8[65536]{0}', space=vmem, size = 0x10000, scoped, tag = 'input window, operand 0']
    #allocation3 [shape = 's32[2]{0}', space=sflag, size = 0x8, scoped, tag = 'scoped memory for tpu_custom_call.1']
    #allocation4 [shape = 's32[2]{0}', space=sflag, size = 0x8, scoped, tag = 'scoped memory for tpu_custom_call.1']
    #allocation5 [shape = 'u8[16384]{0}', space=vmem, size = 0x4000, scoped, tag = 'input window, operand 1, single buffered']
    #allocation6 [shape = 's32[1]{0}', space=sflag, size = 0x4, scoped, tag = 'scoped memory for tpu_custom_call.1']
    #allocation7 [shape = 'u8[8192]{0}', space=vmem, size = 0x2000, scoped, tag = 'output window, operand 0']
    %11 = vsyncpa [#allocation3], 0
    %s12 = scalar_lea.sflag [#allocation3], 1
    %13 = vsyncpa %s12, 0
    %14 = vsyncpa [#allocation6], 0
    %15 = vsyncpa [#allocation4], 0
    %s16 = scalar_lea.sflag [#allocation4], 1
    %17 = vsyncpa %s16, 0
    loop: start=0, step=1, limit=4
    $region2: #{tpu_custom_call.1} parent=1 // loop_pre_header
      _
    $region3: #{tpu_custom_call.1} parent=1 // loop_header
      %s19 = sphi 0, %s23
      %p20 = scmp.ge.s32.totalorder %s19, 4
      %s29 = sphi 0, %s31
      %s32 = sphi 0, %s29
      %s33 = sphi 0, %s32
      %s49 = sphi 0, %s33
      %s53 = sphi 0, %s53
      %s55 = sphi 0, %s53
      %s56 = sphi 0, %s55
      %s70 = sphi 0, %s56
      %s74 = sphi 0, %s74
      %s76 = sphi 0, %s74
      %s77 = sphi 0, %s76
      %s91 = sphi 0, %s77
      %s95 = sphi 0, %s95
      %s97 = sphi 0, %s95
      %s98 = sphi 0, %s97
      %s112 = sphi 0, %s98
      %s118 = sphi 0, %s120
      %s121 = sphi 0, %s118
      %s122 = sphi 0, %s121
      %s138 = sphi 0, %s122
      %s144 = sphi 0, %s146
      %s147 = sphi 0, %s144
      %s148 = sphi 0, %s147
      %s164 = sphi 0, %s148
    $region4: #{tpu_custom_call.1} parent=1 // loop_header_branch
      %22 = sbr.rel (%p20) target = $region8
    $region5: #{tpu_custom_call.1} parent=1 // loop_body
      %s24 = ssub.s32 %s19, 1
      %s25 = ssub.s32 %s19, 2
      %s26 = sadd.s32 %s19, 1
      %s27 = ssub.s32 %s19, %s26
      %p28 = scmp.eq.s32.totalorder %s27, 0
      %s30 = sadd.s32 %s29, 1
      %s31 = scalar_select %p28, %s29, %s30
      %p34 = pneg %p28
      %p35 = scmp.eq.s32.totalorder %s19, 1
      %p36 = por %p34, %p35
      %p37 = scmp.ne.s32.totalorder %s29, %s32
      %p38 = scmp.eq.s32.totalorder %s19, 0
      %p39 = por %p37, %p38
      %p40 = scmp.ne.s32.totalorder %s29, %s32
      %p41 = scmp.eq.s32.totalorder %s24, 1
      %p42 = por %p40, %p41
      %p43 = scmp.ne.s32.totalorder %s32, %s33
      %p44 = scmp.eq.s32.totalorder %s24, 0
      %p45 = por %p43, %p44
      %p46 = scmp.ne.s32.totalorder %s32, %s33
      %p47 = scmp.eq.s32.totalorder %s25, 1
      %p48 = por %p46, %p47
      %p50 = scmp.ne.s32.totalorder %s33, %s49
      %p51 = scmp.eq.s32.totalorder %s25, 0
      %p52 = por %p50, %p51
      %s54 = sadd.s32 %s53, 1
      %p57 = scmp.eq.s32.totalorder %s19, 1
      %p58 = scmp.ne.s32.totalorder %s53, %s55
      %p59 = scmp.eq.s32.totalorder %s19, 0
      %p60 = por %p58, %p59
      %p61 = scmp.ne.s32.totalorder %s53, %s55
      %p62 = scmp.eq.s32.totalorder %s24, 1
      %p63 = por %p61, %p62
      %p64 = scmp.ne.s32.totalorder %s55, %s56
      %p65 = scmp.eq.s32.totalorder %s24, 0
      %p66 = por %p64, %p65
      %p67 = scmp.ne.s32.totalorder %s55, %s56
      %p68 = scmp.eq.s32.totalorder %s25, 1
      %p69 = por %p67, %p68
      %p71 = scmp.ne.s32.totalorder %s56, %s70
      %p72 = scmp.eq.s32.totalorder %s25, 0
      %p73 = por %p71, %p72
      %s75 = sadd.s32 %s74, 1
      %p78 = scmp.eq.s32.totalorder %s19, 1
      %p79 = scmp.ne.s32.totalorder %s74, %s76
      %p80 = scmp.eq.s32.totalorder %s19, 0
      %p81 = por %p79, %p80
      %p82 = scmp.ne.s32.totalorder %s74, %s76
      %p83 = scmp.eq.s32.totalorder %s24, 1
      %p84 = por %p82, %p83
      %p85 = scmp.ne.s32.totalorder %s76, %s77
      %p86 = scmp.eq.s32.totalorder %s24, 0
      %p87 = por %p85, %p86
      %p88 = scmp.ne.s32.totalorder %s76, %s77
      %p89 = scmp.eq.s32.totalorder %s25, 1
      %p90 = por %p88, %p89
      %p92 = scmp.ne.s32.totalorder %s77, %s91
      %p93 = scmp.eq.s32.totalorder %s25, 0
      %p94 = por %p92, %p93
      %s96 = sadd.s32 %s95, 1
      %p99 = scmp.eq.s32.totalorder %s19, 1
      %p100 = scmp.ne.s32.totalorder %s95, %s97
      %p101 = scmp.eq.s32.totalorder %s19, 0
      %p102 = por %p100, %p101
      %p103 = scmp.ne.s32.totalorder %s95, %s97
      %p104 = scmp.eq.s32.totalorder %s24, 1
      %p105 = por %p103, %p104
      %p106 = scmp.ne.s32.totalorder %s97, %s98
      %p107 = scmp.eq.s32.totalorder %s24, 0
      %p108 = por %p106, %p107
      %p109 = scmp.ne.s32.totalorder %s97, %s98
      %p110 = scmp.eq.s32.totalorder %s25, 1
      %p111 = por %p109, %p110
      %p113 = scmp.ne.s32.totalorder %s98, %s112
      %p114 = scmp.eq.s32.totalorder %s25, 0
      %p115 = por %p113, %p114
      %s116 = ssub.s32 %s19, %s26
      %p117 = scmp.eq.s32.totalorder %s116, 0
      %s119 = sadd.s32 %s118, 1
      %s120 = scalar_select %p117, %s118, %s119
      %p123 = pneg %p117
      %p124 = scmp.eq.s32.totalorder %s19, 1
      %p125 = por %p123, %p124
      %p126 = scmp.ne.s32.totalorder %s118, %s121
      %p127 = scmp.eq.s32.totalorder %s19, 0
      %p128 = por %p126, %p127
      %p129 = scmp.ne.s32.totalorder %s118, %s121
      %p130 = scmp.eq.s32.totalorder %s24, 1
      %p131 = por %p129, %p130
      %p132 = scmp.ne.s32.totalorder %s121, %s122
      %p133 = scmp.eq.s32.totalorder %s24, 0
      %p134 = por %p132, %p133
      %p135 = scmp.ne.s32.totalorder %s121, %s122
      %p136 = scmp.eq.s32.totalorder %s25, 1
      %p137 = por %p135, %p136
      %p139 = scmp.ne.s32.totalorder %s122, %s138
      %p140 = scmp.eq.s32.totalorder %s25, 0
      %p141 = por %p139, %p140
      %s142 = ssub.s32 %s19, %s26
      %p143 = scmp.eq.s32.totalorder %s142, 0
      %s145 = sadd.s32 %s144, 1
      %s146 = scalar_select %p143, %s144, %s145
      %p149 = pneg %p143
      %p150 = scmp.eq.s32.totalorder %s19, 1
      %p151 = por %p149, %p150
      %p152 = scmp.ne.s32.totalorder %s144, %s147
      %p153 = scmp.eq.s32.totalorder %s19, 0
      %p154 = por %p152, %p153
      %p155 = scmp.ne.s32.totalorder %s144, %s147
      %p156 = scmp.eq.s32.totalorder %s24, 1
      %p157 = por %p155, %p156
      %p158 = scmp.ne.s32.totalorder %s147, %s148
      %p159 = scmp.eq.s32.totalorder %s24, 0
      %p160 = por %p158, %p159
      %p161 = scmp.ne.s32.totalorder %s147, %s148
      %p162 = scmp.eq.s32.totalorder %s25, 1
      %p163 = por %p161, %p162
      %p165 = scmp.ne.s32.totalorder %s148, %s164
      %p166 = scmp.eq.s32.totalorder %s25, 0
      %p167 = por %p165, %p166
      %p168 = scmp.le.s32.totalorder 1, %s19
      %p169 = scmp.lt.s32.totalorder %s19, 3
      %p170 = pnand %p168, %p169
      %p171 = pneg %p170
      // Predicated region
      $region9: #{tpu_custom_call.1} parent=5 // pred_check
        _
      $region10: #{tpu_custom_call.1} parent=5 // pred_check_branch
        %173 = sbr.rel (%p170) target = $region12
      $region11: #{tpu_custom_call.1} parent=5 // pred_region
        %s174 = ssub.s32 %s19, 1
        // Predicated region
        $region13: #{tpu_custom_call.1} parent=11 // pred_check
          %p175 = pneg %p66
        $region14: #{tpu_custom_call.1} parent=11 // pred_check_branch
          %177 = sbr.rel (%p175) target = $region16
        $region15: #{tpu_custom_call.1} parent=11 // pred_region
          %s179 = ssub.s32 512, 512
          %180 = vsyncadd [#allocation6], %s179
          %s181 = sshll.u32 [#allocation5], 4
          %s182 = int_to_ptr.vmem [resolvable:$true] %s181
          %187 = dma.hbm_to_vmem [thread:$0]  %s1, 512, %s182, [#allocation6], 128, 128, 8
        $region16: #{tpu_custom_call.1} parent=11 // pred_fallthru
          _
        // Predicated region
        $region17: #{tpu_custom_call.1} parent=11 // pred_check
          %p188 = pneg %p87
        $region18: #{tpu_custom_call.1} parent=11 // pred_check_branch
          %190 = sbr.rel (%p188) target = $region20
        $region19: #{tpu_custom_call.1} parent=11 // pred_region
          _
        $region20: #{tpu_custom_call.1} parent=11 // pred_fallthru
          _
        // Predicated region
        $region21: #{tpu_custom_call.1} parent=11 // pred_check
          %p191 = pneg %p108
        $region22: #{tpu_custom_call.1} parent=11 // pred_check_branch
          %193 = sbr.rel (%p191) target = $region24
        $region23: #{tpu_custom_call.1} parent=11 // pred_region
          _
        $region24: #{tpu_custom_call.1} parent=11 // pred_fallthru
          _
      $region12: #{tpu_custom_call.1} parent=5 // pred_fallthru
        _
      %p194 = scmp.lt.s32.totalorder %s19, 2
      // Predicated region
      $region25: #{tpu_custom_call.1} parent=5 // pred_check
        %p195 = pneg %p194
      $region26: #{tpu_custom_call.1} parent=5 // pred_check_branch
        %197 = sbr.rel (%p195) target = $region28
      $region27: #{tpu_custom_call.1} parent=5 // pred_region
        // Predicated region
        $region29: #{tpu_custom_call.1} parent=27 // pred_check
          %p198 = pneg %p39
        $region30: #{tpu_custom_call.1} parent=27 // pred_check_branch
          %200 = sbr.rel (%p198) target = $region32
        $region31: #{tpu_custom_call.1} parent=27 // pred_region
          %s201 = sand.u32 %s29, 1
          %s202 = scalar_lea.sflag [#allocation3], %s201
          %s203 = sand.u32 %s29, 1
          %s204 = smul.addr %s203, 64
          %s205 = scalar_lea.vmem [#allocation2], %s204
          %s206 = smul.u32 8, %s19
          %s208 = ssub.s32 1024, 1024
          %209 = vsyncadd %s202, %s208
          %s210 = smul.addr %s206, 128
          %s211 = scalar_lea.hbm %s0, %s210
          %s212 = sshll.u32 %s205, 4
          %s213 = int_to_ptr.vmem [resolvable:$true] %s212
          %218 = dma.hbm_to_vmem [thread:$0]  %s211, 1024, %s213, %s202, 128, 128, 8
        $region32: #{tpu_custom_call.1} parent=27 // pred_fallthru
          _
      $region28: #{tpu_custom_call.1} parent=5 // pred_fallthru
        _
      %p219 = scmp.le.s32.totalorder 1, %s19
      %p220 = scmp.lt.s32.totalorder %s19, 3
      %p221 = pnand %p219, %p220
      %p222 = pneg %p221
      // Predicated region
      $region33: #{tpu_custom_call.1} parent=5 // pred_check
        _
      $region34: #{tpu_custom_call.1} parent=5 // pred_check_branch
        %224 = sbr.rel (%p221) target = $region36
      $region35: #{tpu_custom_call.1} parent=5 // pred_region
        %s225 = ssub.s32 %s19, 1
        %s226 = sand.u32 %s32, 1
        %s227 = scalar_lea.sflag [#allocation3], %s226
        %s228 = sand.u32 %s32, 1
        %s229 = smul.addr %s228, 64
        %s230 = scalar_lea.vmem [#allocation2], %s229
        // Predicated region
        $region37: #{tpu_custom_call.1} parent=35 // pred_check
          %p231 = pneg %p45
        $region38: #{tpu_custom_call.1} parent=35 // pred_check_branch
          %233 = sbr.rel (%p231) target = $region40
        $region39: #{tpu_custom_call.1} parent=35 // pred_region
          %234 = dma.done %s227, 1024
        $region40: #{tpu_custom_call.1} parent=35 // pred_fallthru
          _
        // Predicated region
        $region41: #{tpu_custom_call.1} parent=35 // pred_check
          %p235 = pneg %p66
        $region42: #{tpu_custom_call.1} parent=35 // pred_check_branch
          %237 = sbr.rel (%p235) target = $region44
        $region43: #{tpu_custom_call.1} parent=35 // pred_region
          %238 = dma.done [#allocation6], 512
        $region44: #{tpu_custom_call.1} parent=35 // pred_fallthru
          _
        %s239 = sand.u32 %s32, 1
        %s240 = scalar_lea.sflag [#allocation3], %s239
        %s241 = sand.u32 %s32, 1
        %s242 = smul.addr %s241, 64
        %s243 = scalar_lea.vmem [#allocation2], %s242
        %p244 = pneg %p45
        %p245 = pneg %p42
        %p246 = pneg %p66
        %p247 = pneg %p63
        %p248 = pneg %p87
        %p249 = pneg %p84
        %p250 = pneg %p108
        %p251 = pneg %p105
        %p252 = pneg %p134
        %p253 = pneg %p131
        %s254 = sand.u32 %s121, 1
        %s255 = scalar_lea.sflag [#allocation4], %s254
        %s256 = sand.u32 %s121, 1
        %s257 = smul.addr %s256, 8
        %s258 = scalar_lea.vmem [#allocation7], %s257
        %p259 = pneg %p160
        %p260 = pneg %p157
        %p261 = scmp.lt.s32.totalorder %s24, 1
        %s262 = scalar_select %p261, %s24, 1
        %s263 = smul.addr %s262, 8
        %s264 = scalar_lea.vmem %s5, %s263
        %s265 = smul.u32 8, %s24
        %p266 = scmp.lt.s32.totalorder %s24, 1
        %s267 = scalar_select %p266, %s24, 1
        %s268 = smul.addr %s267, 8
        %s269 = scalar_lea.vmem %s5, %s268
        %v270 = vld [vmem:[%s230] sm:$0xff]
        %v271 = vld [vmem:[%s230 + $0x8] sm:$0xff]
        %v272 = vld [vmem:[%s230 + $0x10] sm:$0xff]
        %v273 = vld [vmem:[%s230 + $0x18] sm:$0xff]
        %v274 = vld [vmem:[%s230 + $0x20] sm:$0xff]
        %v275 = vld [vmem:[%s230 + $0x28] sm:$0xff]
        %v276 = vld [vmem:[%s230 + $0x30] sm:$0xff]
        %v277 = vld [vmem:[%s230 + $0x38] sm:$0xff]
        %v278 = vld [vmem:[#allocation5] sm:$0xff]
        %v279 = vld [vmem:[#allocation5 + $0x8] sm:$0xff]
        %v280 = vld [vmem:[#allocation5 + $0x10] sm:$0xff]
        %v281 = vld [vmem:[#allocation5 + $0x18] sm:$0xff]
        %v282 = vld [vmem:[%s2] sm:$0x1]
        %v284 = vlaneseq
        %v285 = vshrl.u32 %v284, 7
        %v286 = vsub.s32 0, %v285
        %v287 = vrot.slane %v282, %v286
        %vm289 = vcmask 261120
        %v291 = vsel %vm289, %v270, 0
        %v294 = vsel %vm289, %v271, 0
        %v297 = vsel %vm289, %v272, 0
        %v300 = vsel %vm289, %v273, 0
        %v303 = vsel %vm289, %v274, 0
        %v306 = vsel %vm289, %v275, 0
        %v309 = vsel %vm289, %v276, 0
        %v312 = vsel %vm289, %v277, 0
        %314 = vmatprep.subr.mxu0 0.0
        %315 = vmatpush1.msra.mxu0 %v278
        %316 = vmatprep.subr.mxu0 0.0
        %317 = vmatpush1.msra.mxu0 %v279
        %318 = vmatprep.subr.mxu0 0.0
        %319 = vmatpush1.msra.mxu0 %v280
        %320 = vmatprep.subr.mxu0 0.0
        %321 = vmatpush1.msra.mxu0 %v281
        %322 = vmatprep.subr.mxu0 0.0
        %323 = vmatpush1.msra.mxu0 0.0
        %324 = vmatprep.subr.mxu0 0.0
        %325 = vmatpush1.msra.mxu0 0.0
        %326 = vmatprep.subr.mxu0 0.0
        %327 = vmatpush1.msra.mxu0 0.0
        %328 = vmatprep.subr.mxu0 0.0
        %329 = vmatpush1.msra.mxu0 0.0
        %330 = vmatprep.subr.mxu0 0.0
        %331 = vmatpush1.msra.mxu0 0.0
        %332 = vmatprep.subr.mxu0 0.0
        %333 = vmatpush1.msra.mxu0 0.0
        %334 = vmatprep.subr.mxu0 0.0
        %335 = vmatpush1.msra.mxu0 0.0
        %336 = vmatprep.subr.mxu0 0.0
        %337 = vmatpush1.msra.mxu0 0.0
        %338 = vmatprep.subr.mxu0 0.0
        %339 = vmatpush1.msra.mxu0 0.0
        %340 = vmatprep.subr.mxu0 0.0
        %341 = vmatpush1.msra.mxu0 0.0
        %342 = vmatprep.subr.mxu0 0.0
        %343 = vmatpush1.msra.mxu0 0.0
        %344 = vmatprep.subr.mxu0 0.0
        %345 = vmatpush1.msra.mxu0 0.0
        %346 = vmatprep.subr.mxu0 0.0
        %347 = vmatpush1.msra.mxu0 0.0
        %348 = vmatprep.subr.mxu0 0.0
        %349 = vmatpush1.msra.mxu0 0.0
        %350 = vmatprep.subr.mxu0 0.0
        %351 = vmatpush1.msra.mxu0 0.0
        %352 = vmatprep.subr.mxu0 0.0
        %353 = vmatpush1.msra.mxu0 0.0
        %354 = vmatprep.subr.mxu0 0.0
        %355 = vmatpush1.msra.mxu0 0.0
        %356 = vmatprep.subr.mxu0 0.0
        %357 = vmatpush1.msra.mxu0 0.0
        %358 = vmatprep.subr.mxu0 0.0
        %359 = vmatpush1.msra.mxu0 0.0
        %360 = vmatprep.subr.mxu0 0.0
        %361 = vmatpush1.msra.mxu0 0.0
        %362 = vmatprep.subr.mxu0 0.0
        %363 = vmatpush1.msra.mxu0 0.0
        %364 = vmatprep.subr.mxu0 0.0
        %365 = vmatpush1.msra.mxu0 0.0
        %366 = vmatprep.subr.mxu0 0.0
        %367 = vmatpush1.msra.mxu0 0.0
        %368 = vmatprep.subr.mxu0 0.0
        %369 = vmatpush1.msra.mxu0 0.0
        %370 = vmatprep.subr.mxu0 0.0
        %371 = vmatpush1.msra.mxu0 0.0
        %372 = vmatprep.subr.mxu0 0.0
        %373 = vmatpush1.msra.mxu0 0.0
        %374 = vmatprep.subr.mxu0 0.0
        %375 = vmatpush1.msra.mxu0 0.0
        %376 = vmatprep.subr.mxu0 0.0
        %377 = vmatpush1.msra.mxu0 0.0
        %378 = vmatprep.mubr.f32.mxu0 0.0
        %379 = vmatmul.mubr.f32.gmra.mrb[0].mxu0 %v291
        %v380 = vpop.f32.mrb[0].mxu0
        %v381 = vadd.f32 %v287, %v380
        %v382 = vpop.f32.mrb[0].mxu0
        %383 = vmatprep.mubr.f32.mxu0 0.0
        %384 = vmatmul.mubr.f32.gmra.mrb[0].mxu0 %v294
        %v385 = vpop.f32.mrb[0].mxu0
        %v386 = vadd.f32 %v287, %v385
        %v387 = vpop.f32.mrb[0].mxu0
        %388 = vmatprep.mubr.f32.mxu0 0.0
        %389 = vmatmul.mubr.f32.gmra.mrb[0].mxu0 %v297
        %v390 = vpop.f32.mrb[0].mxu0
        %v391 = vadd.f32 %v287, %v390
        %v392 = vpop.f32.mrb[0].mxu0
        %393 = vmatprep.mubr.f32.mxu0 0.0
        %394 = vmatmul.mubr.f32.gmra.mrb[0].mxu0 %v300
        %v395 = vpop.f32.mrb[0].mxu0
        %v396 = vadd.f32 %v287, %v395
        %v397 = vpop.f32.mrb[0].mxu0
        %398 = vmatprep.mubr.f32.mxu0 0.0
        %399 = vmatmul.mubr.f32.gmra.mrb[0].mxu0 %v303
        %v400 = vpop.f32.mrb[0].mxu0
        %v401 = vadd.f32 %v287, %v400
        %v402 = vpop.f32.mrb[0].mxu0
        %403 = vmatprep.mubr.f32.mxu0 0.0
        %404 = vmatmul.mubr.f32.gmra.mrb[0].mxu0 %v306
        %v405 = vpop.f32.mrb[0].mxu0
        %v406 = vadd.f32 %v287, %v405
        %v407 = vpop.f32.mrb[0].mxu0
        %408 = vmatprep.mubr.f32.mxu0 0.0
        %409 = vmatmul.mubr.f32.gmra.mrb[0].mxu0 %v309
        %v410 = vpop.f32.mrb[0].mxu0
        %v411 = vadd.f32 %v287, %v410
        %v412 = vpop.f32.mrb[0].mxu0
        %413 = vmatprep.mubr.f32.mxu0 0.0
        %414 = vmatmul.mubr.f32.gmra.mrb[0].mxu0 %v312
        %v415 = vpop.f32.mrb[0].mxu0
        %v416 = vadd.f32 %v287, %v415
        %v417 = vpop.f32.mrb[0].mxu0
        %418 = vdwg.mxu0
        %v419 = vtanh.pop %v381
        %v420 = vtanh.pop %v386
        %v421 = vtanh.pop %v391
        %v422 = vtanh.pop %v396
        %v423 = vtanh.pop %v401
        %v424 = vtanh.pop %v406
        %v425 = vtanh.pop %v411
        %v426 = vtanh.pop %v416
        %v427 = vld [vmem:[%s3] sm:$0x1]
        %v429 = vlaneseq
        %v430 = vshrl.u32 %v429, 7
        %v431 = vsub.s32 0, %v430
        %v432 = vrot.slane %v427, %v431
        %v434 = vmul.f32 %v419, %v432
        %v435 = vmul.f32 %v420, %v432
        %v436 = vmul.f32 %v421, %v432
        %v437 = vmul.f32 %v422, %v432
        %v438 = vmul.f32 %v423, %v432
        %v439 = vmul.f32 %v424, %v432
        %v440 = vmul.f32 %v425, %v432
        %v441 = vmul.f32 %v426, %v432
        %v442 = vsel %vm289, %v434, 0.0
        %443 = vadd.xlane.f32.xlu0 %v442
        %v444 = vpop.xlane.xlu0 %443
        %v445 = vsel %vm289, %v435, 0.0
        %446 = vadd.xlane.f32.xlu0 %v445
        %v447 = vpop.xlane.xlu0 %446
        %v448 = vsel %vm289, %v436, 0.0
        %449 = vadd.xlane.f32.xlu0 %v448
        %v450 = vpop.xlane.xlu0 %449
        %v451 = vsel %vm289, %v437, 0.0
        %452 = vadd.xlane.f32.xlu0 %v451
        %v453 = vpop.xlane.xlu0 %452
        %v454 = vsel %vm289, %v438, 0.0
        %455 = vadd.xlane.f32.xlu0 %v454
        %v456 = vpop.xlane.xlu0 %455
        %v457 = vsel %vm289, %v439, 0.0
        %458 = vadd.xlane.f32.xlu0 %v457
        %v459 = vpop.xlane.xlu0 %458
        %v460 = vsel %vm289, %v440, 0.0
        %461 = vadd.xlane.f32.xlu0 %v460
        %v462 = vpop.xlane.xlu0 %461
        %v463 = vsel %vm289, %v441, 0.0
        %464 = vadd.xlane.f32.xlu0 %v463
        %v465 = vpop.xlane.xlu0 %464
        %v474 = vlaneseq
        %v475 = vand.u32 %v474, 127
        %v476 = vlaneseq
        %v477 = vshrl.u32 %v476, 7
        %v478 = vsub.s32 %v475, %v477
        %v479 = vrot.slane %v444, %v478
        %v480 = vlaneseq
        %v481 = vshrl.u32 %v480, 7
        %v482 = vsub.s32 %v475, %v481
        %v483 = vrot.slane %v447, %v482
        %v484 = vlaneseq
        %v485 = vshrl.u32 %v484, 7
        %v486 = vsub.s32 %v475, %v485
        %v487 = vrot.slane %v450, %v486
        %v488 = vlaneseq
        %v489 = vshrl.u32 %v488, 7
        %v490 = vsub.s32 %v475, %v489
        %v491 = vrot.slane %v453, %v490
        %v492 = vlaneseq
        %v493 = vshrl.u32 %v492, 7
        %v494 = vsub.s32 %v475, %v493
        %v495 = vrot.slane %v456, %v494
        %v496 = vlaneseq
        %v497 = vshrl.u32 %v496, 7
        %v498 = vsub.s32 %v475, %v497
        %v499 = vrot.slane %v459, %v498
        %v500 = vlaneseq
        %v501 = vshrl.u32 %v500, 7
        %v502 = vsub.s32 %v475, %v501
        %v503 = vrot.slane %v462, %v502
        %v504 = vlaneseq
        %v505 = vshrl.u32 %v504, 7
        %v506 = vsub.s32 %v475, %v505
        %v507 = vrot.slane %v465, %v506
        %vm508 = vcmask 1041409
        %v509 = vsel %vm508, %v483, %v479
        %vm510 = vcmask 1042434
        %v511 = vsel %vm510, %v487, %v509
        %vm512 = vcmask 1043459
        %v513 = vsel %vm512, %v491, %v511
        %vm514 = vcmask 1044484
        %v515 = vsel %vm514, %v495, %v513
        %vm516 = vcmask 1045509
        %v517 = vsel %vm516, %v499, %v515
        %vm518 = vcmask 1046534
        %v519 = vsel %vm518, %v503, %v517
        %vm520 = vcmask 1047559
        %v521 = vsel %vm520, %v507, %v519
        %vm523 = vcmask 64512
        %v524 = vsel %vm523, %v521, -inf
        %525 = vmax.xlane.f32.xlu0 %v524
        %v526 = vpop.xlane.xlu0 %525
        %v528 = vlaneseq
        %v529 = vshrl.u32 %v528, 7
        %v530 = vsub.s32 0, %v529
        %v531 = vrot.slane %v526, %v530
        %v532 = vlaneseq
        %v533 = vshrl.u32 %v532, 7
        %v534 = vsub.s32 1, %v533
        %v535 = vrot.slane %v526, %v534
        %v536 = vlaneseq
        %v537 = vshrl.u32 %v536, 7
        %v538 = vsub.s32 2, %v537
        %v539 = vrot.slane %v526, %v538
        %v540 = vlaneseq
        %v541 = vshrl.u32 %v540, 7
        %v542 = vsub.s32 3, %v541
        %v543 = vrot.slane %v526, %v542
        %v544 = vlaneseq
        %v545 = vshrl.u32 %v544, 7
        %v546 = vsub.s32 4, %v545
        %v547 = vrot.slane %v526, %v546
        %v548 = vlaneseq
        %v549 = vshrl.u32 %v548, 7
        %v550 = vsub.s32 5, %v549
        %v551 = vrot.slane %v526, %v550
        %v552 = vlaneseq
        %v553 = vshrl.u32 %v552, 7
        %v554 = vsub.s32 6, %v553
        %v555 = vrot.slane %v526, %v554
        %v556 = vlaneseq
        %v557 = vshrl.u32 %v556, 7
        %v558 = vsub.s32 7, %v557
        %v559 = vrot.slane %v526, %v558
        %v568 = vsub.f32 %v444, %v531
        %v569 = vsub.f32 %v447, %v535
        %v570 = vsub.f32 %v450, %v539
        %v571 = vsub.f32 %v453, %v543
        %v572 = vsub.f32 %v456, %v547
        %v573 = vsub.f32 %v459, %v551
        %v574 = vsub.f32 %v462, %v555
        %v575 = vsub.f32 %v465, %v559
        %v576 = vmul.f32 %v568, 1.442695
        %v577 = vpow.pop %v576
        %v578 = vmul.f32 %v569, 1.442695
        %v579 = vpow.pop %v578
        %v580 = vmul.f32 %v570, 1.442695
        %v581 = vpow.pop %v580
        %v582 = vmul.f32 %v571, 1.442695
        %v583 = vpow.pop %v582
        %v584 = vmul.f32 %v572, 1.442695
        %v585 = vpow.pop %v584
        %v586 = vmul.f32 %v573, 1.442695
        %v587 = vpow.pop %v586
        %v588 = vmul.f32 %v574, 1.442695
        %v589 = vpow.pop %v588
        %v590 = vmul.f32 %v575, 1.442695
        %v591 = vpow.pop %v590
        %600 = vset.pattern.permute.xlu0 0
        %601 = vperm.xlu0 %600, %v577
        %v602 = vpop.permute.xlu0 %601
        %603 = vset.pattern.permute.xlu0 0
        %604 = vperm.xlu0 %603, %v579
        %v605 = vpop.permute.xlu0 %604
        %606 = vset.pattern.permute.xlu0 0
        %607 = vperm.xlu0 %606, %v581
        %v608 = vpop.permute.xlu0 %607
        %609 = vset.pattern.permute.xlu0 0
        %610 = vperm.xlu0 %609, %v583
        %v611 = vpop.permute.xlu0 %610
        %612 = vset.pattern.permute.xlu0 0
        %613 = vperm.xlu0 %612, %v585
        %v614 = vpop.permute.xlu0 %613
        %615 = vset.pattern.permute.xlu0 0
        %616 = vperm.xlu0 %615, %v587
        %v617 = vpop.permute.xlu0 %616
        %618 = vset.pattern.permute.xlu0 0
        %619 = vperm.xlu0 %618, %v589
        %v620 = vpop.permute.xlu0 %619
        %621 = vset.pattern.permute.xlu0 0
        %622 = vperm.xlu0 %621, %v591
        %v623 = vpop.permute.xlu0 %622
        %v624 = vlaneseq
        %v625 = vshrl.u32 %v624, 7
        %v626 = vsub.s32 %v475, %v625
        %v627 = vrot.slane %v602, %v626
        %v628 = vlaneseq
        %v629 = vshrl.u32 %v628, 7
        %v630 = vsub.s32 %v475, %v629
        %v631 = vrot.slane %v605, %v630
        %v632 = vlaneseq
        %v633 = vshrl.u32 %v632, 7
        %v634 = vsub.s32 %v475, %v633
        %v635 = vrot.slane %v608, %v634
        %v636 = vlaneseq
        %v637 = vshrl.u32 %v636, 7
        %v638 = vsub.s32 %v475, %v637
        %v639 = vrot.slane %v611, %v638
        %v640 = vlaneseq
        %v641 = vshrl.u32 %v640, 7
        %v642 = vsub.s32 %v475, %v641
        %v643 = vrot.slane %v614, %v642
        %v644 = vlaneseq
        %v645 = vshrl.u32 %v644, 7
        %v646 = vsub.s32 %v475, %v645
        %v647 = vrot.slane %v617, %v646
        %v648 = vlaneseq
        %v649 = vshrl.u32 %v648, 7
        %v650 = vsub.s32 %v475, %v649
        %v651 = vrot.slane %v620, %v650
        %v652 = vlaneseq
        %v653 = vshrl.u32 %v652, 7
        %v654 = vsub.s32 %v475, %v653
        %v655 = vrot.slane %v623, %v654
        %v656 = vsel %vm508, %v631, %v627
        %v657 = vsel %vm510, %v635, %v656
        %v658 = vsel %vm512, %v639, %v657
        %v659 = vsel %vm514, %v643, %v658
        %v660 = vsel %vm516, %v647, %v659
        %v661 = vsel %vm518, %v651, %v660
        %v662 = vsel %vm520, %v655, %v661
        %v664 = vsel %vm523, %v662, 0.0
        %665 = vadd.xlane.f32.xlu0 %v664
        %v666 = vpop.xlane.xlu0 %665
        %v667 = vrcp.pop %v666
        %v669 = vlaneseq
        %v670 = vshrl.u32 %v669, 7
        %v671 = vsub.s32 0, %v670
        %v672 = vrot.slane %v667, %v671
        %v673 = vlaneseq
        %v674 = vshrl.u32 %v673, 7
        %v675 = vsub.s32 1, %v674
        %v676 = vrot.slane %v667, %v675
        %v677 = vlaneseq
        %v678 = vshrl.u32 %v677, 7
        %v679 = vsub.s32 2, %v678
        %v680 = vrot.slane %v667, %v679
        %v681 = vlaneseq
        %v682 = vshrl.u32 %v681, 7
        %v683 = vsub.s32 3, %v682
        %v684 = vrot.slane %v667, %v683
        %v685 = vlaneseq
        %v686 = vshrl.u32 %v685, 7
        %v687 = vsub.s32 4, %v686
        %v688 = vrot.slane %v667, %v687
        %v689 = vlaneseq
        %v690 = vshrl.u32 %v689, 7
        %v691 = vsub.s32 5, %v690
        %v692 = vrot.slane %v667, %v691
        %v693 = vlaneseq
        %v694 = vshrl.u32 %v693, 7
        %v695 = vsub.s32 6, %v694
        %v696 = vrot.slane %v667, %v695
        %v697 = vlaneseq
        %v698 = vshrl.u32 %v697, 7
        %v699 = vsub.s32 7, %v698
        %v700 = vrot.slane %v667, %v699
        %v709 = vmul.f32 %v577, %v672
        %v710 = vmul.f32 %v579, %v676
        %v711 = vmul.f32 %v581, %v680
        %v712 = vmul.f32 %v583, %v684
        %v713 = vmul.f32 %v585, %v688
        %v714 = vmul.f32 %v587, %v692
        %v715 = vmul.f32 %v589, %v696
        %v716 = vmul.f32 %v591, %v700
        %718 = vset.pattern.permute.xlu0 0
        %719 = vperm.xlu0 %718, %v709
        %v720 = vpop.permute.xlu0 %719
        %723 = vset.pattern.permute.xlu0 0
        %724 = vperm.xlu0 %723, %v710
        %v725 = vpop.permute.xlu0 %724
        %728 = vset.pattern.permute.xlu0 0
        %729 = vperm.xlu0 %728, %v711
        %v730 = vpop.permute.xlu0 %729
        %733 = vset.pattern.permute.xlu0 0
        %734 = vperm.xlu0 %733, %v712
        %v735 = vpop.permute.xlu0 %734
        %738 = vset.pattern.permute.xlu0 0
        %739 = vperm.xlu0 %738, %v713
        %v740 = vpop.permute.xlu0 %739
        %743 = vset.pattern.permute.xlu0 0
        %744 = vperm.xlu0 %743, %v714
        %v745 = vpop.permute.xlu0 %744
        %748 = vset.pattern.permute.xlu0 0
        %749 = vperm.xlu0 %748, %v715
        %v750 = vpop.permute.xlu0 %749
        %753 = vset.pattern.permute.xlu0 0
        %754 = vperm.xlu0 %753, %v716
        %v755 = vpop.permute.xlu0 %754
        %v757 = vmul.f32 %v720, %v270
        %v758 = vmul.f32 %v725, %v271
        %v759 = vmul.f32 %v730, %v272
        %v760 = vmul.f32 %v735, %v273
        %v761 = vmul.f32 %v740, %v274
        %v762 = vmul.f32 %v745, %v275
        %v763 = vmul.f32 %v750, %v276
        %v764 = vmul.f32 %v755, %v277
        %v765 = vsel %vm289, %v757, 0.0
        %v766 = vrot.slane %v765, 4
        %v767 = vadd.f32 %v765, %v766
        %v768 = vrot.slane %v767, 2
        %v769 = vadd.f32 %v767, %v768
        %v770 = vrot.slane %v769, 1
        %v771 = vadd.f32 %v769, %v770
        %v772 = vsel %vm289, %v758, 0.0
        %v773 = vrot.slane %v772, 4
        %v774 = vadd.f32 %v772, %v773
        %v775 = vrot.slane %v774, 2
        %v776 = vadd.f32 %v774, %v775
        %v777 = vrot.slane %v776, 1
        %v778 = vadd.f32 %v776, %v777
        %v779 = vsel %vm289, %v759, 0.0
        %v780 = vrot.slane %v779, 4
        %v781 = vadd.f32 %v779, %v780
        %v782 = vrot.slane %v781, 2
        %v783 = vadd.f32 %v781, %v782
        %v784 = vrot.slane %v783, 1
        %v785 = vadd.f32 %v783, %v784
        %v786 = vsel %vm289, %v760, 0.0
        %v787 = vrot.slane %v786, 4
        %v788 = vadd.f32 %v786, %v787
        %v789 = vrot.slane %v788, 2
        %v790 = vadd.f32 %v788, %v789
        %v791 = vrot.slane %v790, 1
        %v792 = vadd.f32 %v790, %v791
        %v793 = vsel %vm289, %v761, 0.0
        %v794 = vrot.slane %v793, 4
        %v795 = vadd.f32 %v793, %v794
        %v796 = vrot.slane %v795, 2
        %v797 = vadd.f32 %v795, %v796
        %v798 = vrot.slane %v797, 1
        %v799 = vadd.f32 %v797, %v798
        %v800 = vsel %vm289, %v762, 0.0
        %v801 = vrot.slane %v800, 4
        %v802 = vadd.f32 %v800, %v801
        %v803 = vrot.slane %v802, 2
        %v804 = vadd.f32 %v802, %v803
        %v805 = vrot.slane %v804, 1
        %v806 = vadd.f32 %v804, %v805
        %v807 = vsel %vm289, %v763, 0.0
        %v808 = vrot.slane %v807, 4
        %v809 = vadd.f32 %v807, %v808
        %v810 = vrot.slane %v809, 2
        %v811 = vadd.f32 %v809, %v810
        %v812 = vrot.slane %v811, 1
        %v813 = vadd.f32 %v811, %v812
        %v814 = vsel %vm289, %v764, 0.0
        %v815 = vrot.slane %v814, 4
        %v816 = vadd.f32 %v814, %v815
        %v817 = vrot.slane %v816, 2
        %v818 = vadd.f32 %v816, %v817
        %v819 = vrot.slane %v818, 1
        %v820 = vadd.f32 %v818, %v819
        %v829 = vsel %vm508, %v778, %v771
        %v830 = vsel %vm510, %v785, %v829
        %v831 = vsel %vm512, %v792, %v830
        %v832 = vsel %vm514, %v799, %v831
        %v833 = vsel %vm516, %v806, %v832
        %v834 = vsel %vm518, %v813, %v833
        %v835 = vsel %vm520, %v820, %v834
        %837 = vst.msk [vmem:[%s258] sm:$0xff] %vm289, %v835
        %v838 = vlaneseq
        %v839 = vshrl.u32 %v838, 7
        %v840 = vsub.s32 %v475, %v839
        %v841 = vrot.slane %v720, %v840
        %v842 = vlaneseq
        %v843 = vshrl.u32 %v842, 7
        %v844 = vsub.s32 %v475, %v843
        %v845 = vrot.slane %v725, %v844
        %v846 = vlaneseq
        %v847 = vshrl.u32 %v846, 7
        %v848 = vsub.s32 %v475, %v847
        %v849 = vrot.slane %v730, %v848
        %v850 = vlaneseq
        %v851 = vshrl.u32 %v850, 7
        %v852 = vsub.s32 %v475, %v851
        %v853 = vrot.slane %v735, %v852
        %v854 = vlaneseq
        %v855 = vshrl.u32 %v854, 7
        %v856 = vsub.s32 %v475, %v855
        %v857 = vrot.slane %v740, %v856
        %v858 = vlaneseq
        %v859 = vshrl.u32 %v858, 7
        %v860 = vsub.s32 %v475, %v859
        %v861 = vrot.slane %v745, %v860
        %v862 = vlaneseq
        %v863 = vshrl.u32 %v862, 7
        %v864 = vsub.s32 %v475, %v863
        %v865 = vrot.slane %v750, %v864
        %v866 = vlaneseq
        %v867 = vshrl.u32 %v866, 7
        %v868 = vsub.s32 %v475, %v867
        %v869 = vrot.slane %v755, %v868
        %v870 = vsel %vm508, %v845, %v841
        %v871 = vsel %vm510, %v849, %v870
        %v872 = vsel %vm512, %v853, %v871
        %v873 = vsel %vm514, %v857, %v872
        %v874 = vsel %vm516, %v861, %v873
        %v875 = vsel %vm518, %v865, %v874
        %v876 = vsel %vm520, %v869, %v875
        %878 = vst.msk [vmem:[%s269] sm:$0xff] %vm523, %v876
        %s879 = sand.u32 %s121, 1
        %s880 = scalar_lea.sflag [#allocation4], %s879
        %s881 = sand.u32 %s121, 1
        %s882 = smul.addr %s881, 8
        %s883 = scalar_lea.vmem [#allocation7], %s882
        %p884 = scmp.lt.s32.totalorder %s24, 1
        %s885 = scalar_select %p884, %s24, 1
        %s886 = smul.addr %s885, 8
        %s887 = scalar_lea.vmem %s5, %s886
        // Predicated region
        $region45: #{tpu_custom_call.1} parent=35 // pred_check
          %p888 = pneg %p131
        $region46: #{tpu_custom_call.1} parent=35 // pred_check_branch
          %890 = sbr.rel (%p888) target = $region48
        $region47: #{tpu_custom_call.1} parent=35 // pred_region
          %s892 = ssub.s32 128, 128
          %893 = vsyncadd %s880, %s892
          %s894 = smul.addr %s24, 128
          %s895 = scalar_lea.hbm %s4, %s894
          %s897 = sshll.u32 %s883, 4
          %s898 = int_to_ptr.vmem [resolvable:$true] %s897
          %900 = dma.vmem_to_hbm [thread:$0]  %s898, 128, %s895, %s880
        $region48: #{tpu_custom_call.1} parent=35 // pred_fallthru
          _
        // Predicated region
        $region49: #{tpu_custom_call.1} parent=35 // pred_check
          %p901 = pneg %p157
        $region50: #{tpu_custom_call.1} parent=35 // pred_check_branch
          %903 = sbr.rel (%p901) target = $region52
        $region51: #{tpu_custom_call.1} parent=35 // pred_region
          _
        $region52: #{tpu_custom_call.1} parent=35 // pred_fallthru
          _
      $region36: #{tpu_custom_call.1} parent=5 // pred_fallthru
        _
      %p904 = scmp.le.s32.totalorder 2, %s19
      // Predicated region
      $region53: #{tpu_custom_call.1} parent=5 // pred_check
        %p905 = pneg %p904
      $region54: #{tpu_custom_call.1} parent=5 // pred_check_branch
        %907 = sbr.rel (%p905) target = $region56
      $region55: #{tpu_custom_call.1} parent=5 // pred_region
        %s908 = ssub.s32 %s19, 2
        // Predicated region
        $region57: #{tpu_custom_call.1} parent=55 // pred_check
          %p909 = pneg %p137
        $region58: #{tpu_custom_call.1} parent=55 // pred_check_branch
          %911 = sbr.rel (%p909) target = $region60
        $region59: #{tpu_custom_call.1} parent=55 // pred_region
          %s912 = sand.u32 %s122, 1
          %s913 = scalar_lea.sflag [#allocation4], %s912
          %s914 = sand.u32 %s122, 1
          %s915 = smul.addr %s914, 8
          %s916 = scalar_lea.vmem [#allocation7], %s915
          %917 = dma.done %s913, 128
        $region60: #{tpu_custom_call.1} parent=55 // pred_fallthru
          _
        // Predicated region
        $region61: #{tpu_custom_call.1} parent=55 // pred_check
          %p918 = pneg %p163
        $region62: #{tpu_custom_call.1} parent=55 // pred_check_branch
          %920 = sbr.rel (%p918) target = $region64
        $region63: #{tpu_custom_call.1} parent=55 // pred_region
          %p921 = scmp.lt.s32.totalorder %s25, 1
          %s922 = scalar_select %p921, %s25, 1
          %s923 = smul.addr %s922, 8
          %s924 = scalar_lea.vmem %s5, %s923
        $region64: #{tpu_custom_call.1} parent=55 // pred_fallthru
          _
      $region56: #{tpu_custom_call.1} parent=5 // pred_fallthru
        _
    $region6: #{tpu_custom_call.1} parent=1 // loop_footer
      %s23 = sadd.s32 1, %s19
    $region7: #{tpu_custom_call.1} parent=1 // loop_footer_branch
      %18 = sbr.rel target = $region3
    $region8: #{tpu_custom_call.1} parent=1 // loop_exit
      _
    %925 = vsyncpa [#allocation3], 1
    %s926 = scalar_lea.sflag [#allocation3], 1
    %927 = vsyncpa %s926, 1
    %928 = vsyncpa [#allocation6], 1
    %929 = vsyncpa [#allocation4], 1
    %s930 = scalar_lea.sflag [#allocation4], 1
    %931 = vsyncpa %s930, 1

</llo_original>
